<compile_context>
chip_gen: v5e
topology: v5e:2x2
jax: 0.10.0
libtpu: 0.0.40
codegen_flags: <defaults>
</compile_context>

<pallas_src>
import functools

import jax
import jax.numpy as jnp
from jax.experimental import pallas as pl
from jax.experimental.pallas import tpu as pltpu


def _round_up(n, m):
    return (n + m - 1) // m * m


# ---------------------------------------------------------------- kernel ----

def _encoder_kernel(x1_ref, w1_ref, b1_ref, w2_ref, b2_ref, w3_ref, b3_ref,
                    o_ref, *, K, L2_pad, L3_pad, L3):
    # x1_ref: (Bt, L1_pad, K*C_in)  conv1 im2col rows (bf16, tap-major cols)
    # w1_ref: (K*C_in, 32) bf16     K-folded conv1 weights
    # w2_ref: (K, 32, 64)  bf16     per-tap conv2 weights
    # w3_ref: (K, 64, C3p) bf16     per-tap conv3 weights (C3p = 128, padded)
    # b*_ref: (1, C_out)   f32
    # o_ref : (Bt, C3p)    f32      global-max-pooled features
    Bt, L1_pad, KC = x1_ref.shape
    C1 = w1_ref.shape[1]
    C2 = w2_ref.shape[2]
    C3 = w3_ref.shape[2]

    # ---- conv1: single K-folded dot, batch flattened into M = Bt*L1_pad ----
    x1 = x1_ref[...].reshape(Bt * L1_pad, KC)
    h1 = jnp.dot(x1, w1_ref[...], preferred_element_type=jnp.float32)
    h1 = jnp.maximum(h1 + b1_ref[...], 0.0).astype(jnp.bfloat16)
    h1 = h1.reshape(Bt, L1_pad, C1)

    # ---- conv2: tap accumulation (K dots of depth 32), M = Bt*L2_pad -------
    acc2 = jnp.dot(h1[:, 0:L2_pad, :].reshape(Bt * L2_pad, C1), w2_ref[0],
                   preferred_element_type=jnp.float32)
    for k in range(1, K):
        lhs = h1[:, k:k + L2_pad, :].reshape(Bt * L2_pad, C1)
        acc2 = acc2 + jnp.dot(lhs, w2_ref[k],
                              preferred_element_type=jnp.float32)
    h2 = jnp.maximum(acc2 + b2_ref[...], 0.0).astype(jnp.bfloat16)
    h2 = h2.reshape(Bt, L2_pad, C2)

    # ---- conv3: tap accumulation (K dots of depth 64), M = Bt*L3_pad -------
    acc3 = jnp.dot(h2[:, 0:L3_pad, :].reshape(Bt * L3_pad, C2), w3_ref[0],
                   preferred_element_type=jnp.float32)
    for k in range(1, K):
        lhs = h2[:, k:k + L3_pad, :].reshape(Bt * L3_pad, C2)
        acc3 = acc3 + jnp.dot(lhs, w3_ref[k],
                              preferred_element_type=jnp.float32)
    h3 = jnp.maximum(acc3 + b3_ref[...], 0.0)
    h3 = h3.reshape(Bt, L3_pad, C3)

    # ---- AdaptiveMaxPool1d(1): max over the VALID length rows only ---------
    o_ref[...] = jnp.max(h3[:, :L3, :], axis=1).astype(o_ref.dtype)


# --------------------------------------------------------------- wrapper ----

def simclr_har_encoder_forward(params, obs_ncl, *, stride):
    """obs_ncl: (B, C_in, L) PyTorch NCL input. Returns (B, 96)."""
    w1, b1 = params["w1"], params["b1"]
    w2, b2 = params["w2"], params["b2"]
    w3, b3 = params["w3"], params["b3"]
    C1_out, C_in, K = w1.shape
    C2_out = w2.shape[0]
    C3_out = w3.shape[0]

    B, _, L = obs_ncl.shape
    L1 = (L - K) // stride + 1
    L2 = L1 - K + 1
    L3 = L2 - K + 1
    assert L3 >= 1, "input too short for three valid convolutions"

    # Length padding (multiples of 8) chosen top-down so every in-kernel tap
    # slice h[:, k:k+Lnext_pad, :] stays in bounds.
    L3p = _round_up(L3, 8)
    L2p = _round_up(L3p + K - 1, 8)
    L1p = _round_up(L2p + K - 1, 8)
    C3p = _round_up(C3_out, 128)          # lane-dense output block

    # Batch tiling: flatten Bt elements into the matmul M dim per grid step.
    # Per-element VMEM footprint is a few KB, so Bt=128 is comfortably inside
    # v7x's 64 MiB VMEM while amortizing the per-step pipeline overhead.
    Bt = min(B, 128)
    Bpad = _round_up(B, Bt)
    G = Bpad // Bt

    # channels-last (lane = channels, sublane = length)
    x = jnp.transpose(obs_ncl, (0, 2, 1)).astype(jnp.float32)      # (B, L, C_in)

    # conv1 im2col (tap-major columns) built in the wrapper — a few KB; keeps
    # strided sublane slicing out of the kernel. Column order matches fold().
    x1 = jnp.concatenate(
        [x[:, k:k + stride * (L1 - 1) + 1:stride, :] for k in range(K)],
        axis=-1).astype(jnp.bfloat16)                              # (B, L1, K*C_in)
    # zero-pad batch and length; padded rows never reach the max pool
    x1 = jnp.pad(x1, ((0, Bpad - B), (0, L1p - L1), (0, 0)))

    def fold1(w):   # (C_out, C_in, K) -> (K*C_in, C_out), tap-major rows
        c_out, c_in, k = w.shape
        return jnp.transpose(w, (2, 1, 0)).reshape(k * c_in, c_out)

    def taps(w):    # (C_out, C_in, K) -> (K, C_in, C_out)
        return jnp.transpose(w, (2, 1, 0))

    w1f = fold1(w1).astype(jnp.bfloat16)                           # (K*C_in, 32)
    w2t = taps(w2).astype(jnp.bfloat16)                            # (K, 32, 64)
    w3t = jnp.pad(taps(w3).astype(jnp.bfloat16),
                  ((0, 0), (0, 0), (0, C3p - C3_out)))             # (K, 64, 128)
    b1r = b1.reshape(1, C1_out).astype(jnp.float32)
    b2r = b2.reshape(1, C2_out).astype(jnp.float32)
    b3r = jnp.pad(b3.reshape(1, C3_out).astype(jnp.float32),
                  ((0, 0), (0, C3p - C3_out)))                     # (1, 128)

    kern = functools.partial(_encoder_kernel, K=K, L2_pad=L2p, L3_pad=L3p,
                             L3=L3)

    out = pl.pallas_call(
        kern,
        out_shape=jax.ShapeDtypeStruct((Bpad, C3p), jnp.float32),
        grid=(G,),
        in_specs=[
            pl.BlockSpec((Bt, L1p, K * C_in), lambda i: (i, 0, 0)),
            pl.BlockSpec((K * C_in, C1_out), lambda i: (0, 0)),
            pl.BlockSpec((1, C1_out), lambda i: (0, 0)),
            pl.BlockSpec((K, C1_out, C2_out), lambda i: (0, 0, 0)),
            pl.BlockSpec((1, C2_out), lambda i: (0, 0)),
            pl.BlockSpec((K, C2_out, C3p), lambda i: (0, 0, 0)),
            pl.BlockSpec((1, C3p), lambda i: (0, 0)),
        ],
        out_specs=pl.BlockSpec((Bt, C3p), lambda i: (i, 0)),
        compiler_params=pltpu.CompilerParams(
            dimension_semantics=("parallel",)),
    )(x1, w1f, b1r, w2t, b2r, w3t, b3r)

    # AdaptiveMaxPool1d(1) + .squeeze() -> (B, 96) for B > 1.
    # TODO(synk): PyTorch .squeeze() at B == 1 would also drop the batch dim;
    #             we keep the (B, C) form.
    return out[:B, :C3_out]


# ----------------------------------------------------- pure-JAX reference ---

def _reference_forward(params, obs_ncl, *, stride):
    def conv1d(x, w, b, s):
        y = jax.lax.conv_general_dilated(
            x, w, window_strides=(s,), padding="VALID",
            dimension_numbers=("NCH", "OIH", "NCH"))
        return y + b[None, :, None]

    h = jnp.maximum(conv1d(obs_ncl, params["w1"], params["b1"], stride), 0.0)
    h = jnp.maximum(conv1d(h, params["w2"], params["b2"], 1), 0.0)
    h = jnp.maximum(conv1d(h, params["w3"], params["b3"], 1), 0.0)
    return jnp.max(h, axis=-1)        # AdaptiveMaxPool1d(1) + squeeze


# ------------------------------------------------------------------- main ---

if __name__ == "__main__":
    model_params = dict(kernel_size=4, input_size=4, stride=2, num_classes=6)
    K = int(model_params["kernel_size"])
    C_in = int(model_params["input_size"])
    S = int(model_params["stride"])
    B, L = 2, 64

    key = jax.random.PRNGKey(0)
    ks = jax.random.split(key, 7)

    def conv_params(kw, kb, c_out, c_in):
        w = jax.random.normal(kw, (c_out, c_in, K), jnp.float32) * 0.1
        b = jax.random.normal(kb, (c_out,), jnp.float32) * 0.1
        return w, b

    w1, b1 = conv_params(ks[0], ks[1], 32, C_in)
    w2, b2 = conv_params(ks[2], ks[3], 64, 32)
    w3, b3 = conv_params(ks[4], ks[5], 96, 64)
    params = dict(w1=w1, b1=b1, w2=w2, b2=b2, w3=w3, b3=b3)

    obs = jax.random.normal(ks[6], (B, C_in, L), jnp.float32)

    out = jax.block_until_ready(
        simclr_har_encoder_forward(params, obs, stride=S))

    ref = _reference_forward(params, obs, stride=S)
    assert out.shape == (B, 96), out.shape
    assert bool(jnp.all(jnp.isfinite(out)))
    assert bool(jnp.allclose(out, ref, rtol=3e-2, atol=3e-2)), (
        float(jnp.max(jnp.abs(out - ref))))
    print("KERNEL_OK")
</pallas_src>

<mosaic_0001>
module attributes {stable_mosaic.version = 11 : i64} {
  func.func @_encoder_kernel(%arg0: i32, %arg1: memref<2x48x16xbf16, #tpu.memory_space<vmem>>, %arg2: memref<16x32xbf16, #tpu.memory_space<vmem>>, %arg3: memref<1x32xf32, #tpu.memory_space<vmem>>, %arg4: memref<4x32x64xbf16, #tpu.memory_space<vmem>>, %arg5: memref<1x64xf32, #tpu.memory_space<vmem>>, %arg6: memref<4x64x128xbf16, #tpu.memory_space<vmem>>, %arg7: memref<1x128xf32, #tpu.memory_space<vmem>>, %arg8: memref<2x128xf32, #tpu.memory_space<vmem>>) attributes {dimension_semantics = [#tpu.dimension_semantics<parallel>], iteration_bounds = array<i64: 1>, scalar_prefetch = 0 : i64, scratch_operands = 0 : i64, tpu.core_type = #tpu.core_type<tc>, window_params = [{transform_indices = @transform_0, window_bounds = array<i64: 2, 48, 16>}, {pipeline_mode = #tpu.pipeline_mode<synchronous>, transform_indices = @transform_1, window_bounds = array<i64: 16, 32>}, {pipeline_mode = #tpu.pipeline_mode<synchronous>, transform_indices = @transform_2, window_bounds = array<i64: 1, 32>}, {pipeline_mode = #tpu.pipeline_mode<synchronous>, transform_indices = @transform_3, window_bounds = array<i64: 4, 32, 64>}, {pipeline_mode = #tpu.pipeline_mode<synchronous>, transform_indices = @transform_4, window_bounds = array<i64: 1, 64>}, {pipeline_mode = #tpu.pipeline_mode<synchronous>, transform_indices = @transform_5, window_bounds = array<i64: 4, 64, 128>}, {pipeline_mode = #tpu.pipeline_mode<synchronous>, transform_indices = @transform_6, window_bounds = array<i64: 1, 128>}, {transform_indices = @transform_7, window_bounds = array<i64: 2, 128>}]} {
    %c0 = arith.constant 0 : index
    %c0_0 = arith.constant 0 : index
    %c0_1 = arith.constant 0 : index
    %0 = vector.load %arg1[%c0, %c0_0, %c0_1] : memref<2x48x16xbf16, #tpu.memory_space<vmem>>, vector<2x48x16xbf16>
    %1 = vector.shape_cast %0 : vector<2x48x16xbf16> to vector<96x16xbf16>
    %c0_2 = arith.constant 0 : index
    %c0_3 = arith.constant 0 : index
    %2 = vector.load %arg2[%c0_2, %c0_3] : memref<16x32xbf16, #tpu.memory_space<vmem>>, vector<16x32xbf16>
    %cst = arith.constant dense<0.000000e+00> : vector<96x32xf32>
    %3 = tpu.matmul %1, %2, %cst {dimension_numbers = #tpu.dot_dimension_numbers<[1], [0], [0], [1], [0, 0, 1, 1], [], []>} : vector<96x16xbf16>, vector<16x32xbf16>, vector<96x32xf32> -> vector<96x32xf32>
    %c0_4 = arith.constant 0 : index
    %c0_5 = arith.constant 0 : index
    %4 = vector.load %arg3[%c0_4, %c0_5] : memref<1x32xf32, #tpu.memory_space<vmem>>, vector<1x32xf32>
    %5 = vector.broadcast %4 : vector<1x32xf32> to vector<96x32xf32>
    %6 = arith.addf %3, %5 : vector<96x32xf32>
    %cst_6 = arith.constant 0.000000e+00 : f32
    %7 = vector.broadcast %cst_6 : f32 to vector<96x32xf32>
    %8 = arith.maximumf %6, %7 : vector<96x32xf32>
    %9 = arith.truncf %8 : vector<96x32xf32> to vector<96x32xbf16>
    %10 = vector.shape_cast %9 : vector<96x32xbf16> to vector<2x48x32xbf16>
    %11 = vector.extract_strided_slice %10 {offsets = [0, 0, 0], sizes = [2, 40, 32], strides = [1, 1, 1]} : vector<2x48x32xbf16> to vector<2x40x32xbf16>
    %12 = vector.shape_cast %11 : vector<2x40x32xbf16> to vector<80x32xbf16>
    %c0_7 = arith.constant 0 : index
    %c0_8 = arith.constant 0 : index
    %c0_9 = arith.constant 0 : index
    %13 = vector.load %arg4[%c0_7, %c0_8, %c0_9] : memref<4x32x64xbf16, #tpu.memory_space<vmem>>, vector<1x32x64xbf16>
    %14 = vector.shape_cast %13 : vector<1x32x64xbf16> to vector<32x64xbf16>
    %cst_10 = arith.constant dense<0.000000e+00> : vector<80x64xf32>
    %15 = tpu.matmul %12, %14, %cst_10 {dimension_numbers = #tpu.dot_dimension_numbers<[1], [0], [0], [1], [0, 0, 1, 1], [], []>} : vector<80x32xbf16>, vector<32x64xbf16>, vector<80x64xf32> -> vector<80x64xf32>
    %16 = vector.extract_strided_slice %10 {offsets = [0, 1, 0], sizes = [2, 40, 32], strides = [1, 1, 1]} : vector<2x48x32xbf16> to vector<2x40x32xbf16>
    %17 = vector.shape_cast %16 : vector<2x40x32xbf16> to vector<80x32xbf16>
    %c1 = arith.constant 1 : index
    %c0_11 = arith.constant 0 : index
    %c0_12 = arith.constant 0 : index
    %18 = vector.load %arg4[%c1, %c0_11, %c0_12] : memref<4x32x64xbf16, #tpu.memory_space<vmem>>, vector<1x32x64xbf16>
    %19 = vector.shape_cast %18 : vector<1x32x64xbf16> to vector<32x64xbf16>
    %cst_13 = arith.constant dense<0.000000e+00> : vector<80x64xf32>
    %20 = tpu.matmul %17, %19, %cst_13 {dimension_numbers = #tpu.dot_dimension_numbers<[1], [0], [0], [1], [0, 0, 1, 1], [], []>} : vector<80x32xbf16>, vector<32x64xbf16>, vector<80x64xf32> -> vector<80x64xf32>
    %21 = arith.addf %15, %20 : vector<80x64xf32>
    %22 = vector.extract_strided_slice %10 {offsets = [0, 2, 0], sizes = [2, 40, 32], strides = [1, 1, 1]} : vector<2x48x32xbf16> to vector<2x40x32xbf16>
    %23 = vector.shape_cast %22 : vector<2x40x32xbf16> to vector<80x32xbf16>
    %c2 = arith.constant 2 : index
    %c0_14 = arith.constant 0 : index
    %c0_15 = arith.constant 0 : index
    %24 = vector.load %arg4[%c2, %c0_14, %c0_15] : memref<4x32x64xbf16, #tpu.memory_space<vmem>>, vector<1x32x64xbf16>
    %25 = vector.shape_cast %24 : vector<1x32x64xbf16> to vector<32x64xbf16>
    %cst_16 = arith.constant dense<0.000000e+00> : vector<80x64xf32>
    %26 = tpu.matmul %23, %25, %cst_16 {dimension_numbers = #tpu.dot_dimension_numbers<[1], [0], [0], [1], [0, 0, 1, 1], [], []>} : vector<80x32xbf16>, vector<32x64xbf16>, vector<80x64xf32> -> vector<80x64xf32>
    %27 = arith.addf %21, %26 : vector<80x64xf32>
    %28 = vector.extract_strided_slice %10 {offsets = [0, 3, 0], sizes = [2, 40, 32], strides = [1, 1, 1]} : vector<2x48x32xbf16> to vector<2x40x32xbf16>
    %29 = vector.shape_cast %28 : vector<2x40x32xbf16> to vector<80x32xbf16>
    %c3 = arith.constant 3 : index
    %c0_17 = arith.constant 0 : index
    %c0_18 = arith.constant 0 : index
    %30 = vector.load %arg4[%c3, %c0_17, %c0_18] : memref<4x32x64xbf16, #tpu.memory_space<vmem>>, vector<1x32x64xbf16>
    %31 = vector.shape_cast %30 : vector<1x32x64xbf16> to vector<32x64xbf16>
    %cst_19 = arith.constant dense<0.000000e+00> : vector<80x64xf32>
    %32 = tpu.matmul %29, %31, %cst_19 {dimension_numbers = #tpu.dot_dimension_numbers<[1], [0], [0], [1], [0, 0, 1, 1], [], []>} : vector<80x32xbf16>, vector<32x64xbf16>, vector<80x64xf32> -> vector<80x64xf32>
    %33 = arith.addf %27, %32 : vector<80x64xf32>
    %c0_20 = arith.constant 0 : index
    %c0_21 = arith.constant 0 : index
    %34 = vector.load %arg5[%c0_20, %c0_21] : memref<1x64xf32, #tpu.memory_space<vmem>>, vector<1x64xf32>
    %35 = vector.broadcast %34 : vector<1x64xf32> to vector<80x64xf32>
    %36 = arith.addf %33, %35 : vector<80x64xf32>
    %cst_22 = arith.constant 0.000000e+00 : f32
    %37 = vector.broadcast %cst_22 : f32 to vector<80x64xf32>
    %38 = arith.maximumf %36, %37 : vector<80x64xf32>
    %39 = arith.truncf %38 : vector<80x64xf32> to vector<80x64xbf16>
    %40 = vector.shape_cast %39 : vector<80x64xbf16> to vector<2x40x64xbf16>
    %41 = vector.extract_strided_slice %40 {offsets = [0, 0, 0], sizes = [2, 32, 64], strides = [1, 1, 1]} : vector<2x40x64xbf16> to vector<2x32x64xbf16>
    %42 = vector.shape_cast %41 : vector<2x32x64xbf16> to vector<64x64xbf16>
    %c0_23 = arith.constant 0 : index
    %c0_24 = arith.constant 0 : index
    %c0_25 = arith.constant 0 : index
    %43 = vector.load %arg6[%c0_23, %c0_24, %c0_25] : memref<4x64x128xbf16, #tpu.memory_space<vmem>>, vector<1x64x128xbf16>
    %44 = vector.shape_cast %43 : vector<1x64x128xbf16> to vector<64x128xbf16>
    %cst_26 = arith.constant dense<0.000000e+00> : vector<64x128xf32>
    %45 = tpu.matmul %42, %44, %cst_26 {dimension_numbers = #tpu.dot_dimension_numbers<[1], [0], [0], [1], [0, 0, 1, 1], [], []>} : vector<64x64xbf16>, vector<64x128xbf16>, vector<64x128xf32> -> vector<64x128xf32>
    %46 = vector.extract_strided_slice %40 {offsets = [0, 1, 0], sizes = [2, 32, 64], strides = [1, 1, 1]} : vector<2x40x64xbf16> to vector<2x32x64xbf16>
    %47 = vector.shape_cast %46 : vector<2x32x64xbf16> to vector<64x64xbf16>
    %c1_27 = arith.constant 1 : index
    %c0_28 = arith.constant 0 : index
    %c0_29 = arith.constant 0 : index
    %48 = vector.load %arg6[%c1_27, %c0_28, %c0_29] : memref<4x64x128xbf16, #tpu.memory_space<vmem>>, vector<1x64x128xbf16>
    %49 = vector.shape_cast %48 : vector<1x64x128xbf16> to vector<64x128xbf16>
    %cst_30 = arith.constant dense<0.000000e+00> : vector<64x128xf32>
    %50 = tpu.matmul %47, %49, %cst_30 {dimension_numbers = #tpu.dot_dimension_numbers<[1], [0], [0], [1], [0, 0, 1, 1], [], []>} : vector<64x64xbf16>, vector<64x128xbf16>, vector<64x128xf32> -> vector<64x128xf32>
    %51 = arith.addf %45, %50 : vector<64x128xf32>
    %52 = vector.extract_strided_slice %40 {offsets = [0, 2, 0], sizes = [2, 32, 64], strides = [1, 1, 1]} : vector<2x40x64xbf16> to vector<2x32x64xbf16>
    %53 = vector.shape_cast %52 : vector<2x32x64xbf16> to vector<64x64xbf16>
    %c2_31 = arith.constant 2 : index
    %c0_32 = arith.constant 0 : index
    %c0_33 = arith.constant 0 : index
    %54 = vector.load %arg6[%c2_31, %c0_32, %c0_33] : memref<4x64x128xbf16, #tpu.memory_space<vmem>>, vector<1x64x128xbf16>
    %55 = vector.shape_cast %54 : vector<1x64x128xbf16> to vector<64x128xbf16>
    %cst_34 = arith.constant dense<0.000000e+00> : vector<64x128xf32>
    %56 = tpu.matmul %53, %55, %cst_34 {dimension_numbers = #tpu.dot_dimension_numbers<[1], [0], [0], [1], [0, 0, 1, 1], [], []>} : vector<64x64xbf16>, vector<64x128xbf16>, vector<64x128xf32> -> vector<64x128xf32>
    %57 = arith.addf %51, %56 : vector<64x128xf32>
    %58 = vector.extract_strided_slice %40 {offsets = [0, 3, 0], sizes = [2, 32, 64], strides = [1, 1, 1]} : vector<2x40x64xbf16> to vector<2x32x64xbf16>
    %59 = vector.shape_cast %58 : vector<2x32x64xbf16> to vector<64x64xbf16>
    %c3_35 = arith.constant 3 : index
    %c0_36 = arith.constant 0 : index
    %c0_37 = arith.constant 0 : index
    %60 = vector.load %arg6[%c3_35, %c0_36, %c0_37] : memref<4x64x128xbf16, #tpu.memory_space<vmem>>, vector<1x64x128xbf16>
    %61 = vector.shape_cast %60 : vector<1x64x128xbf16> to vector<64x128xbf16>
    %cst_38 = arith.constant dense<0.000000e+00> : vector<64x128xf32>
    %62 = tpu.matmul %59, %61, %cst_38 {dimension_numbers = #tpu.dot_dimension_numbers<[1], [0], [0], [1], [0, 0, 1, 1], [], []>} : vector<64x64xbf16>, vector<64x128xbf16>, vector<64x128xf32> -> vector<64x128xf32>
    %63 = arith.addf %57, %62 : vector<64x128xf32>
    %c0_39 = arith.constant 0 : index
    %c0_40 = arith.constant 0 : index
    %64 = vector.load %arg7[%c0_39, %c0_40] : memref<1x128xf32, #tpu.memory_space<vmem>>, vector<1x128xf32>
    %65 = vector.broadcast %64 : vector<1x128xf32> to vector<64x128xf32>
    %66 = arith.addf %63, %65 : vector<64x128xf32>
    %cst_41 = arith.constant 0.000000e+00 : f32
    %67 = vector.broadcast %cst_41 : f32 to vector<64x128xf32>
    %68 = arith.maximumf %66, %67 : vector<64x128xf32>
    %69 = vector.shape_cast %68 : vector<64x128xf32> to vector<2x32x128xf32>
    %70 = vector.extract_strided_slice %69 {offsets = [0, 0, 0], sizes = [2, 25, 128], strides = [1, 1, 1]} : vector<2x32x128xf32> to vector<2x25x128xf32>
    %cst_42 = arith.constant dense<0xFF800000> : vector<2x128xf32>
    %71 = vector.multi_reduction <maximumf>, %70, %cst_42 [1] : vector<2x25x128xf32> to vector<2x128xf32>
    %c0_43 = arith.constant 0 : index
    %c0_44 = arith.constant 0 : index
    %72 = vector.load %arg8[%c0_43, %c0_44] : memref<2x128xf32, #tpu.memory_space<vmem>>, vector<2x128xf32>
    tpu.vector_store %arg8[%c0_43, %c0_44], %71 {strides = array<i32>} : memref<2x128xf32, #tpu.memory_space<vmem>>, vector<2x128xf32>,
    return
  }
  func.func @transform_0(%arg0: i32) -> (i32, i32, i32) {
    %c0_i32 = arith.constant 0 : i32
    %c0_i32_0 = arith.constant 0 : i32
    %c0_i32_1 = arith.constant 0 : i32
    return %arg0, %c0_i32, %c0_i32_0 : i32, i32, i32
  }
  func.func @transform_1(%arg0: i32) -> (i32, i32) {
    %c0_i32 = arith.constant 0 : i32
    %c0_i32_0 = arith.constant 0 : i32
    %c0_i32_1 = arith.constant 0 : i32
    return %c0_i32, %c0_i32_0 : i32, i32
  }
  func.func @transform_2(%arg0: i32) -> (i32, i32) {
    %c0_i32 = arith.constant 0 : i32
    %c0_i32_0 = arith.constant 0 : i32
    %c0_i32_1 = arith.constant 0 : i32
    return %c0_i32, %c0_i32_0 : i32, i32
  }
  func.func @transform_3(%arg0: i32) -> (i32, i32, i32) {
    %c0_i32 = arith.constant 0 : i32
    %c0_i32_0 = arith.constant 0 : i32
    %c0_i32_1 = arith.constant 0 : i32
    %c0_i32_2 = arith.constant 0 : i32
    return %c0_i32, %c0_i32_0, %c0_i32_1 : i32, i32, i32
  }
  func.func @transform_4(%arg0: i32) -> (i32, i32) {
    %c0_i32 = arith.constant 0 : i32
    %c0_i32_0 = arith.constant 0 : i32
    %c0_i32_1 = arith.constant 0 : i32
    return %c0_i32, %c0_i32_0 : i32, i32
  }
  func.func @transform_5(%arg0: i32) -> (i32, i32, i32) {
    %c0_i32 = arith.constant 0 : i32
    %c0_i32_0 = arith.constant 0 : i32
    %c0_i32_1 = arith.constant 0 : i32
    %c0_i32_2 = arith.constant 0 : i32
    return %c0_i32, %c0_i32_0, %c0_i32_1 : i32, i32, i32
  }
  func.func @transform_6(%arg0: i32) -> (i32, i32) {
    %c0_i32 = arith.constant 0 : i32
    %c0_i32_0 = arith.constant 0 : i32
    %c0_i32_1 = arith.constant 0 : i32
    return %c0_i32, %c0_i32_0 : i32, i32
  }
  func.func @transform_7(%arg0: i32) -> (i32, i32) {
    %c0_i32 = arith.constant 0 : i32
    %c0_i32_0 = arith.constant 0 : i32
    return %arg0, %c0_i32 : i32, i32
  }
}

</mosaic_0001>

<llo_original>
// kernel: tpu_custom_call.1
$region0: #{tpu_custom_call.1}
  #allocation0 [shape = 'u32[]', space=smem, size = 0x4, offset = 0x4, fixed_abs, tag = 'smem constant byte address 0x4 - core index']
  #allocation1 [shape = 'u32[72,128]{1,0:T(1,128)}', space=vmem, size = 0x9000, scoped, tag = 'internal scratch']
  %s0 = inlined_call_operand.vmem [shape: bf16[2,48,16], index: 0, kind: input, shape index: {}]
  %s1 = inlined_call_operand.hbm [shape: bf16[16,32], index: 1, kind: input, shape index: {}]
  %s2 = inlined_call_operand.vmem [shape: f32[1,32], index: 2, kind: input, shape index: {}]
  %s3 = inlined_call_operand.vmem [shape: bf16[4,32,64], index: 3, kind: input, shape index: {}]
  %s4 = inlined_call_operand.vmem [shape: f32[1,64], index: 4, kind: input, shape index: {}]
  %s5 = inlined_call_operand.hbm [shape: bf16[4,64,128], index: 5, kind: input, shape index: {}]
  %s6 = inlined_call_operand.vmem [shape: f32[1,128], index: 6, kind: input, shape index: {}]
  %s7 = inlined_call_operand.hbm [shape: f32[2,128], index: 7, kind: output, shape index: {}]
  %s8 = sld [smem:[#allocation0]]
  $region46: #{tpu_custom_call.1} parent=0
    _
  %s10 = ssub.s32 1, %s8
  %s11 = scalar_select 0, %s10, %s8
  $region1: #{tpu_custom_call.1} parent=0
    #allocation2 [shape = 'u8[4096]{0}', space=vmem, size = 0x1000, scoped, tag = 'input window, operand 1, single buffered']
    #allocation3 [shape = 's32[1]{0}', space=sflag, size = 0x4, scoped, tag = 'scoped memory for tpu_custom_call.1']
    #allocation4 [shape = 's32[1]{0}', space=sflag, size = 0x4, scoped, tag = 'scoped memory for tpu_custom_call.1']
    #allocation5 [shape = 'u8[65536]{0}', space=vmem, size = 0x10000, scoped, tag = 'input window, operand 5, single buffered']
    #allocation6 [shape = 's32[1]{0}', space=sflag, size = 0x4, scoped, tag = 'scoped memory for tpu_custom_call.1']
    #allocation7 [shape = 'u8[1024]{0}', space=vmem, size = 0x400, scoped, tag = 'output window, operand 0, single buffered']
    %12 = vsyncpa [#allocation3], 0
    %13 = vsyncpa [#allocation6], 0
    %14 = vsyncpa [#allocation4], 0
    // Predicated region
    $region2: #{tpu_custom_call.1} parent=1 // pred_check
      _
    $region3: #{tpu_custom_call.1} parent=1 // pred_check_branch
      %16 = sbr.rel (0) target = $region5
    $region4: #{tpu_custom_call.1} parent=1 // pred_region
      _
    $region5: #{tpu_custom_call.1} parent=1 // pred_fallthru
      _
    // Predicated region
    $region6: #{tpu_custom_call.1} parent=1 // pred_check
      _
    $region7: #{tpu_custom_call.1} parent=1 // pred_check_branch
      %18 = sbr.rel (0) target = $region9
    $region8: #{tpu_custom_call.1} parent=1 // pred_region
      %20 = vsyncadd [#allocation3], 0
      %s21 = sshll.u32 %s1, 4
      %s22 = int_to_ptr.hbm [resolvable:$true] %s21
      %s23 = sshll.u32 [#allocation2], 4
      %s24 = int_to_ptr.vmem [resolvable:$true] %s23
      %29 = dma.hbm_to_vmem [thread:$0]  %s22, 128, %s24, [#allocation3], 64, 64, 4
    $region9: #{tpu_custom_call.1} parent=1 // pred_fallthru
      _
    // Predicated region
    $region10: #{tpu_custom_call.1} parent=1 // pred_check
      _
    $region11: #{tpu_custom_call.1} parent=1 // pred_check_branch
      %31 = sbr.rel (0) target = $region13
    $region12: #{tpu_custom_call.1} parent=1 // pred_region
      _
    $region13: #{tpu_custom_call.1} parent=1 // pred_fallthru
      _
    // Predicated region
    $region14: #{tpu_custom_call.1} parent=1 // pred_check
      _
    $region15: #{tpu_custom_call.1} parent=1 // pred_check_branch
      %33 = sbr.rel (0) target = $region17
    $region16: #{tpu_custom_call.1} parent=1 // pred_region
      _
    $region17: #{tpu_custom_call.1} parent=1 // pred_fallthru
      _
    // Predicated region
    $region18: #{tpu_custom_call.1} parent=1 // pred_check
      _
    $region19: #{tpu_custom_call.1} parent=1 // pred_check_branch
      %35 = sbr.rel (0) target = $region21
    $region20: #{tpu_custom_call.1} parent=1 // pred_region
      _
    $region21: #{tpu_custom_call.1} parent=1 // pred_fallthru
      _
    // Predicated region
    $region22: #{tpu_custom_call.1} parent=1 // pred_check
      _
    $region23: #{tpu_custom_call.1} parent=1 // pred_check_branch
      %37 = sbr.rel (0) target = $region25
    $region24: #{tpu_custom_call.1} parent=1 // pred_region
      %39 = vsyncadd [#allocation6], 0
      %s40 = sshll.u32 %s5, 4
      %s41 = int_to_ptr.hbm [resolvable:$true] %s40
      %s42 = sshll.u32 [#allocation5], 4
      %s43 = int_to_ptr.vmem [resolvable:$true] %s42
      %48 = dma.hbm_to_vmem [thread:$0]  %s41, 2048, %s43, [#allocation6], 64, 64, 4
    $region25: #{tpu_custom_call.1} parent=1 // pred_fallthru
      _
    // Predicated region
    $region26: #{tpu_custom_call.1} parent=1 // pred_check
      _
    $region27: #{tpu_custom_call.1} parent=1 // pred_check_branch
      %50 = sbr.rel (0) target = $region29
    $region28: #{tpu_custom_call.1} parent=1 // pred_region
      _
    $region29: #{tpu_custom_call.1} parent=1 // pred_fallthru
      _
    // Predicated region
    $region30: #{tpu_custom_call.1} parent=1 // pred_check
      _
    $region31: #{tpu_custom_call.1} parent=1 // pred_check_branch
      %52 = sbr.rel (0) target = $region33
    $region32: #{tpu_custom_call.1} parent=1 // pred_region
      %54 = dma.done [#allocation3], 128
    $region33: #{tpu_custom_call.1} parent=1 // pred_fallthru
      _
    // Predicated region
    $region34: #{tpu_custom_call.1} parent=1 // pred_check
      _
    $region35: #{tpu_custom_call.1} parent=1 // pred_check_branch
      %56 = sbr.rel (0) target = $region37
    $region36: #{tpu_custom_call.1} parent=1 // pred_region
      %58 = dma.done [#allocation6], 2048
    $region37: #{tpu_custom_call.1} parent=1 // pred_fallthru
      _
    %v60 = vld [vmem:[%s0] sm:$0xf]
    %v61 = vld [vmem:[%s0 + $0x4] sm:$0xf]
    %v62 = vld [vmem:[%s0 + $0x8] sm:$0xf]
    %v63 = vld [vmem:[%s0 + $0xc] sm:$0xf]
    %v64 = vld [vmem:[%s0 + $0x10] sm:$0xf]
    %v65 = vld [vmem:[%s0 + $0x14] sm:$0xf]
    %v66 = vld [vmem:[%s0 + $0x18] sm:$0xf]
    %v67 = vld [vmem:[%s0 + $0x1c] sm:$0xf]
    %v68 = vld [vmem:[%s0 + $0x20] sm:$0xf]
    %v69 = vld [vmem:[%s0 + $0x24] sm:$0xf]
    %v70 = vld [vmem:[%s0 + $0x28] sm:$0xf]
    %v71 = vld [vmem:[%s0 + $0x2c] sm:$0xf]
    %v72 = vld [vmem:[#allocation2] sm:$0xf]
    %v73 = vld [vmem:[#allocation2 + $0x4] sm:$0xf]
    %v74 = vld [vmem:[%s2] sm:$0x1]
    %v76 = vperm.slane %v74, 0
    %v90 = vunpack.c.l.b16 %v60
    %v91 = vunpack.c.l.b16 %v61
    %v92 = vunpack.c.l.b16 %v62
    %v93 = vunpack.c.l.b16 %v63
    %v94 = vunpack.c.l.b16 %v64
    %v95 = vunpack.c.l.b16 %v65
    %v96 = vunpack.c.l.b16 %v66
    %v97 = vunpack.c.l.b16 %v67
    %v98 = vunpack.c.l.b16 %v68
    %v99 = vunpack.c.l.b16 %v69
    %v100 = vunpack.c.l.b16 %v70
    %v101 = vunpack.c.l.b16 %v71
    %v102 = vpack.c.b16 %v91, %v90
    %v103 = vpack.c.b16 %v93, %v92
    %v104 = vpack.c.b16 %v95, %v94
    %v105 = vpack.c.b16 %v97, %v96
    %v106 = vpack.c.b16 %v99, %v98
    %v107 = vpack.c.b16 %v101, %v100
    %v110 = vunpack.c.l.b16 %v72
    %v111 = vunpack.c.l.b16 %v73
    %v112 = vpack.c.b16 %v111, %v110
    %vm114 = vcmask 130048
    %v116 = vsel %vm114, %v102, 0
    %v119 = vsel %vm114, %v103, 0
    %v122 = vsel %vm114, %v104, 0
    %v125 = vsel %vm114, %v105, 0
    %v128 = vsel %vm114, %v106, 0
    %v131 = vsel %vm114, %v107, 0
    %133 = vmatpush.bf16.msra.mxu0 0
    %134 = vmatpush.bf16.msra.mxu0 0
    %135 = vmatpush.bf16.msra.mxu0 0
    %136 = vmatpush.bf16.msra.mxu0 0
    %137 = vmatpush.bf16.msra.mxu0 0
    %138 = vmatpush.bf16.msra.mxu0 0
    %139 = vmatpush.bf16.msra.mxu0 0
    %140 = vmatpush.bf16.msra.mxu0 %v112
    %141 = vmatmul.bf16.gmra.mxu0 %v116
    %v142 = vpop.f32.mrf.mxu0
    %v143 = vadd.f32 %v76, %v142
    %v144 = vpop.f32.mrf.mxu0
    %v145 = vadd.f32 %v76, %v144
    %146 = vmatmul.bf16.gmra.mxu0 %v119
    %v147 = vpop.f32.mrf.mxu0
    %v148 = vadd.f32 %v76, %v147
    %v149 = vpop.f32.mrf.mxu0
    %v150 = vadd.f32 %v76, %v149
    %151 = vmatmul.bf16.gmra.mxu0 %v122
    %v152 = vpop.f32.mrf.mxu0
    %v153 = vadd.f32 %v76, %v152
    %v154 = vpop.f32.mrf.mxu0
    %v155 = vadd.f32 %v76, %v154
    %156 = vmatmul.bf16.gmra.mxu0 %v125
    %v157 = vpop.f32.mrf.mxu0
    %v158 = vadd.f32 %v76, %v157
    %v159 = vpop.f32.mrf.mxu0
    %v160 = vadd.f32 %v76, %v159
    %161 = vmatmul.bf16.gmra.mxu0 %v128
    %v162 = vpop.f32.mrf.mxu0
    %v163 = vadd.f32 %v76, %v162
    %v164 = vpop.f32.mrf.mxu0
    %v165 = vadd.f32 %v76, %v164
    %166 = vmatmul.bf16.gmra.mxu0 %v131
    %v167 = vpop.f32.mrf.mxu0
    %v168 = vadd.f32 %v76, %v167
    %v169 = vpop.f32.mrf.mxu0
    %v170 = vadd.f32 %v76, %v169
    %171 = vdwg.mxu0
    %v172 = vmax.f32 %v143, 0.0
    %v173 = vmax.f32 %v145, 0.0
    %v174 = vmax.f32 %v148, 0.0
    %v175 = vmax.f32 %v150, 0.0
    %v176 = vmax.f32 %v153, 0.0
    %v177 = vmax.f32 %v155, 0.0
    %v178 = vmax.f32 %v158, 0.0
    %v179 = vmax.f32 %v160, 0.0
    %v180 = vmax.f32 %v163, 0.0
    %v181 = vmax.f32 %v165, 0.0
    %v182 = vmax.f32 %v168, 0.0
    %v183 = vmax.f32 %v170, 0.0
    %v184 = vpack.c.bf16 %v172, %v172
    %v185 = vpack.c.bf16 %v173, %v173
    %v186 = vpack.c.bf16 %v174, %v174
    %v187 = vpack.c.bf16 %v175, %v175
    %v188 = vpack.c.bf16 %v176, %v176
    %v189 = vpack.c.bf16 %v177, %v177
    %v190 = vpack.c.bf16 %v178, %v178
    %v191 = vpack.c.bf16 %v179, %v179
    %v192 = vpack.c.bf16 %v180, %v180
    %v193 = vpack.c.bf16 %v181, %v181
    %v194 = vpack.c.bf16 %v182, %v182
    %v195 = vpack.c.bf16 %v183, %v183
    %v196 = vld [vmem:[%s3] sm:$0xf]
    %v197 = vld [vmem:[%s3 + $0x4] sm:$0xf]
    %v198 = vld [vmem:[%s3 + $0x8] sm:$0xf]
    %v199 = vld [vmem:[%s3 + $0xc] sm:$0xf]
    %vm200 = vsmask.f32 3328
    %vm201 = vsmask.f32 7440
    %vm202 = vmor %vm200, %vm201
    %v204 = vshrl.u32 %v184, 16
    %v206 = vrot.slane %v204, 4
    %v207 = vshll.u32 %v184, 16
    %v209 = vrot.slane %v207, 5
    %v210 = vor.u32 %v206, %v209
    %v211 = vrot.slane %v210, 4
    %v213 = vshll.u32 %v185, 16
    %v215 = vrot.slane %v213, 5
    %v216 = vsel %vm202, %v211, %v215
    %v217 = vshrl.u32 %v185, 16
    %v219 = vrot.slane %v217, 4
    %v220 = vor.u32 %v219, %v215
    %v221 = vrot.slane %v220, 4
    %v223 = vshll.u32 %v186, 16
    %v225 = vrot.slane %v223, 5
    %v226 = vsel %vm202, %v221, %v225
    %v227 = vshrl.u32 %v186, 16
    %v229 = vrot.slane %v227, 4
    %v230 = vor.u32 %v229, %v225
    %v231 = vrot.slane %v230, 4
    %v233 = vshll.u32 %v187, 16
    %v235 = vrot.slane %v233, 5
    %v236 = vsel %vm202, %v231, %v235
    %v237 = vshrl.u32 %v187, 16
    %v239 = vrot.slane %v237, 4
    %v240 = vor.u32 %v239, %v235
    %v241 = vrot.slane %v240, 4
    %v243 = vshll.u32 %v188, 16
    %v245 = vrot.slane %v243, 5
    %v246 = vsel %vm202, %v241, %v245
    %v247 = vshrl.u32 %v188, 16
    %v249 = vrot.slane %v247, 4
    %v250 = vor.u32 %v249, %v245
    %v251 = vrot.slane %v250, 4
    %v253 = vshll.u32 %v189, 16
    %v255 = vrot.slane %v253, 5
    %v256 = vsel %vm202, %v251, %v255
    %v258 = vshrl.u32 %v190, 16
    %v260 = vrot.slane %v258, 4
    %v261 = vshll.u32 %v190, 16
    %v263 = vrot.slane %v261, 5
    %v264 = vor.u32 %v260, %v263
    %v265 = vrot.slane %v264, 4
    %v267 = vshll.u32 %v191, 16
    %v269 = vrot.slane %v267, 5
    %v270 = vsel %vm202, %v265, %v269
    %v271 = vshrl.u32 %v191, 16
    %v273 = vrot.slane %v271, 4
    %v274 = vor.u32 %v273, %v269
    %v275 = vrot.slane %v274, 4
    %v277 = vshll.u32 %v192, 16
    %v279 = vrot.slane %v277, 5
    %v280 = vsel %vm202, %v275, %v279
    %v281 = vshrl.u32 %v192, 16
    %v283 = vrot.slane %v281, 4
    %v284 = vor.u32 %v283, %v279
    %v285 = vrot.slane %v284, 4
    %v287 = vshll.u32 %v193, 16
    %v289 = vrot.slane %v287, 5
    %v290 = vsel %vm202, %v285, %v289
    %v291 = vshrl.u32 %v193, 16
    %v293 = vrot.slane %v291, 4
    %v294 = vor.u32 %v293, %v289
    %v295 = vrot.slane %v294, 4
    %v297 = vshll.u32 %v194, 16
    %v299 = vrot.slane %v297, 5
    %v300 = vsel %vm202, %v295, %v299
    %v301 = vshrl.u32 %v194, 16
    %v303 = vrot.slane %v301, 4
    %v304 = vor.u32 %v303, %v299
    %v305 = vrot.slane %v304, 4
    %v307 = vshll.u32 %v195, 16
    %v309 = vrot.slane %v307, 5
    %v310 = vsel %vm202, %v305, %v309
    %s311 = scalar_lea.vmem %s3, 16
    %v312 = vld [vmem:[%s311] sm:$0xf]
    %v313 = vld [vmem:[%s311 + $0x4] sm:$0xf]
    %v314 = vld [vmem:[%s311 + $0x8] sm:$0xf]
    %v315 = vld [vmem:[%s311 + $0xc] sm:$0xf]
    %v316 = vunpack.c.l.b16 %v216
    %v317 = vunpack.c.l.b16 %v226
    %v318 = vunpack.c.l.b16 %v236
    %v319 = vunpack.c.l.b16 %v246
    %v320 = vunpack.c.l.b16 %v256
    %v321 = vunpack.c.l.b16 %v270
    %v322 = vunpack.c.l.b16 %v280
    %v323 = vunpack.c.l.b16 %v290
    %v324 = vunpack.c.l.b16 %v300
    %v325 = vunpack.c.l.b16 %v310
    %v326 = vpack.c.b16 %v317, %v316
    %v327 = vpack.c.b16 %v319, %v318
    %v328 = vpack.c.b16 %v321, %v320
    %v329 = vpack.c.b16 %v323, %v322
    %v330 = vpack.c.b16 %v325, %v324
    %v335 = vunpack.c.l.b16 %v312
    %v336 = vunpack.c.l.b16 %v313
    %v337 = vunpack.c.l.b16 %v314
    %v338 = vunpack.c.l.b16 %v315
    %v339 = vpack.c.b16 %v336, %v335
    %v340 = vpack.c.b16 %v338, %v337
    %vm343 = vcmask 261120
    %v345 = vsel %vm343, %v326, 0
    %v348 = vsel %vm343, %v327, 0
    %v351 = vsel %vm343, %v328, 0
    %v354 = vsel %vm343, %v329, 0
    %v357 = vsel %vm343, %v330, 0
    %359 = vmatpush.bf16.msra.mxu0 0
    %360 = vmatpush.bf16.msra.mxu0 0
    %361 = vmatpush.bf16.msra.mxu0 0
    %362 = vmatpush.bf16.msra.mxu0 0
    %363 = vmatpush.bf16.msra.mxu0 0
    %364 = vmatpush.bf16.msra.mxu0 0
    %365 = vmatpush.bf16.msra.mxu0 %v340
    %366 = vmatpush.bf16.msra.mxu0 %v339
    %367 = vmatmul.bf16.gmra.mxu0 %v345
    %v368 = vpop.f32.mrf.mxu0
    %v369 = vadd.f32 0.0, %v368
    %v370 = vpop.f32.mrf.mxu0
    %v371 = vadd.f32 0.0, %v370
    %372 = vmatmul.bf16.gmra.mxu0 %v348
    %v373 = vpop.f32.mrf.mxu0
    %v374 = vadd.f32 0.0, %v373
    %v375 = vpop.f32.mrf.mxu0
    %v376 = vadd.f32 0.0, %v375
    %377 = vmatmul.bf16.gmra.mxu0 %v351
    %v378 = vpop.f32.mrf.mxu0
    %v379 = vadd.f32 0.0, %v378
    %v380 = vpop.f32.mrf.mxu0
    %v381 = vadd.f32 0.0, %v380
    %382 = vmatmul.bf16.gmra.mxu0 %v354
    %v383 = vpop.f32.mrf.mxu0
    %v384 = vadd.f32 0.0, %v383
    %v385 = vpop.f32.mrf.mxu0
    %v386 = vadd.f32 0.0, %v385
    %387 = vmatmul.bf16.gmra.mxu0 %v357
    %v388 = vpop.f32.mrf.mxu0
    %v389 = vadd.f32 0.0, %v388
    %v390 = vpop.f32.mrf.mxu0
    %v391 = vadd.f32 0.0, %v390
    %392 = vdwg.mxu0
    %v403 = vunpack.c.l.b16 %v184
    %v404 = vunpack.c.l.b16 %v185
    %v405 = vunpack.c.l.b16 %v186
    %v406 = vunpack.c.l.b16 %v187
    %v407 = vunpack.c.l.b16 %v188
    %v408 = vunpack.c.l.b16 %v190
    %v409 = vunpack.c.l.b16 %v191
    %v410 = vunpack.c.l.b16 %v192
    %v411 = vunpack.c.l.b16 %v193
    %v412 = vunpack.c.l.b16 %v194
    %v413 = vpack.c.b16 %v404, %v403
    %v414 = vpack.c.b16 %v406, %v405
    %v415 = vpack.c.b16 %v408, %v407
    %v416 = vpack.c.b16 %v410, %v409
    %v417 = vpack.c.b16 %v412, %v411
    %v422 = vunpack.c.l.b16 %v196
    %v423 = vunpack.c.l.b16 %v197
    %v424 = vunpack.c.l.b16 %v198
    %v425 = vunpack.c.l.b16 %v199
    %v426 = vpack.c.b16 %v423, %v422
    %v427 = vpack.c.b16 %v425, %v424
    %v431 = vsel %vm343, %v413, 0
    %v434 = vsel %vm343, %v414, 0
    %v437 = vsel %vm343, %v415, 0
    %v440 = vsel %vm343, %v416, 0
    %v443 = vsel %vm343, %v417, 0
    %445 = vmatpush.bf16.msra.mxu0 0
    %446 = vmatpush.bf16.msra.mxu0 0
    %447 = vmatpush.bf16.msra.mxu0 0
    %448 = vmatpush.bf16.msra.mxu0 0
    %449 = vmatpush.bf16.msra.mxu0 0
    %450 = vmatpush.bf16.msra.mxu0 0
    %451 = vmatpush.bf16.msra.mxu0 %v427
    %452 = vmatpush.bf16.msra.mxu0 %v426
    %453 = vmatmul.bf16.gmra.mxu0 %v431
    %v454 = vpop.f32.mrf.mxu0
    %v455 = vadd.f32 %v369, %v454
    %v456 = vpop.f32.mrf.mxu0
    %v457 = vadd.f32 %v371, %v456
    %458 = vmatmul.bf16.gmra.mxu0 %v434
    %v459 = vpop.f32.mrf.mxu0
    %v460 = vadd.f32 %v374, %v459
    %v461 = vpop.f32.mrf.mxu0
    %v462 = vadd.f32 %v376, %v461
    %463 = vmatmul.bf16.gmra.mxu0 %v437
    %v464 = vpop.f32.mrf.mxu0
    %v465 = vadd.f32 %v379, %v464
    %v466 = vpop.f32.mrf.mxu0
    %v467 = vadd.f32 %v381, %v466
    %468 = vmatmul.bf16.gmra.mxu0 %v440
    %v469 = vpop.f32.mrf.mxu0
    %v470 = vadd.f32 %v384, %v469
    %v471 = vpop.f32.mrf.mxu0
    %v472 = vadd.f32 %v386, %v471
    %473 = vmatmul.bf16.gmra.mxu0 %v443
    %v474 = vpop.f32.mrf.mxu0
    %v475 = vadd.f32 %v389, %v474
    %v476 = vpop.f32.mrf.mxu0
    %v477 = vadd.f32 %v391, %v476
    %478 = vdwg.mxu0
    %vm481 = vcmask 1042432
    %vm482 = vcmask 1046532
    %vm483 = vmor %vm481, %vm482
    %v484 = vrot.slane %v184, 5
    %v485 = vrot.slane %v484, 4
    %v486 = vrot.slane %v185, 5
    %v487 = vsel %vm483, %v485, %v486
    %v488 = vrot.slane %v486, 4
    %v489 = vrot.slane %v186, 5
    %v490 = vsel %vm483, %v488, %v489
    %v491 = vrot.slane %v489, 4
    %v492 = vrot.slane %v187, 5
    %v493 = vsel %vm483, %v491, %v492
    %v494 = vrot.slane %v492, 4
    %v495 = vrot.slane %v188, 5
    %v496 = vsel %vm483, %v494, %v495
    %v497 = vrot.slane %v495, 4
    %v498 = vrot.slane %v189, 5
    %v499 = vsel %vm483, %v497, %v498
    %v500 = vrot.slane %v190, 5
    %v501 = vrot.slane %v500, 4
    %v502 = vrot.slane %v191, 5
    %v503 = vsel %vm483, %v501, %v502
    %v504 = vrot.slane %v502, 4
    %v505 = vrot.slane %v192, 5
    %v506 = vsel %vm483, %v504, %v505
    %v507 = vrot.slane %v505, 4
    %v508 = vrot.slane %v193, 5
    %v509 = vsel %vm483, %v507, %v508
    %v510 = vrot.slane %v508, 4
    %v511 = vrot.slane %v194, 5
    %v512 = vsel %vm483, %v510, %v511
    %v513 = vrot.slane %v511, 4
    %v514 = vrot.slane %v195, 5
    %v515 = vsel %vm483, %v513, %v514
    %s516 = scalar_lea.vmem %s3, 32
    %v517 = vld [vmem:[%s516] sm:$0xf]
    %v518 = vld [vmem:[%s516 + $0x4] sm:$0xf]
    %v519 = vld [vmem:[%s516 + $0x8] sm:$0xf]
    %v520 = vld [vmem:[%s516 + $0xc] sm:$0xf]
    %v521 = vunpack.c.l.b16 %v487
    %v522 = vunpack.c.l.b16 %v490
    %v523 = vunpack.c.l.b16 %v493
    %v524 = vunpack.c.l.b16 %v496
    %v525 = vunpack.c.l.b16 %v499
    %v526 = vunpack.c.l.b16 %v503
    %v527 = vunpack.c.l.b16 %v506
    %v528 = vunpack.c.l.b16 %v509
    %v529 = vunpack.c.l.b16 %v512
    %v530 = vunpack.c.l.b16 %v515
    %v531 = vpack.c.b16 %v522, %v521
    %v532 = vpack.c.b16 %v524, %v523
    %v533 = vpack.c.b16 %v526, %v525
    %v534 = vpack.c.b16 %v528, %v527
    %v535 = vpack.c.b16 %v530, %v529
    %v540 = vunpack.c.l.b16 %v517
    %v541 = vunpack.c.l.b16 %v518
    %v542 = vunpack.c.l.b16 %v519
    %v543 = vunpack.c.l.b16 %v520
    %v544 = vpack.c.b16 %v541, %v540
    %v545 = vpack.c.b16 %v543, %v542
    %v549 = vsel %vm343, %v531, 0
    %v552 = vsel %vm343, %v532, 0
    %v555 = vsel %vm343, %v533, 0
    %v558 = vsel %vm343, %v534, 0
    %v561 = vsel %vm343, %v535, 0
    %563 = vmatpush.bf16.msra.mxu0 0
    %564 = vmatpush.bf16.msra.mxu0 0
    %565 = vmatpush.bf16.msra.mxu0 0
    %566 = vmatpush.bf16.msra.mxu0 0
    %567 = vmatpush.bf16.msra.mxu0 0
    %568 = vmatpush.bf16.msra.mxu0 0
    %569 = vmatpush.bf16.msra.mxu0 %v545
    %570 = vmatpush.bf16.msra.mxu0 %v544
    %571 = vmatmul.bf16.gmra.mxu0 %v549
    %v572 = vpop.f32.mrf.mxu0
    %v573 = vadd.f32 0.0, %v572
    %v574 = vpop.f32.mrf.mxu0
    %v575 = vadd.f32 0.0, %v574
    %576 = vmatmul.bf16.gmra.mxu0 %v552
    %v577 = vpop.f32.mrf.mxu0
    %v578 = vadd.f32 0.0, %v577
    %v579 = vpop.f32.mrf.mxu0
    %v580 = vadd.f32 0.0, %v579
    %581 = vmatmul.bf16.gmra.mxu0 %v555
    %v582 = vpop.f32.mrf.mxu0
    %v583 = vadd.f32 0.0, %v582
    %v584 = vpop.f32.mrf.mxu0
    %v585 = vadd.f32 0.0, %v584
    %586 = vmatmul.bf16.gmra.mxu0 %v558
    %v587 = vpop.f32.mrf.mxu0
    %v588 = vadd.f32 0.0, %v587
    %v589 = vpop.f32.mrf.mxu0
    %v590 = vadd.f32 0.0, %v589
    %591 = vmatmul.bf16.gmra.mxu0 %v561
    %v592 = vpop.f32.mrf.mxu0
    %v593 = vadd.f32 0.0, %v592
    %v594 = vpop.f32.mrf.mxu0
    %v595 = vadd.f32 0.0, %v594
    %596 = vdwg.mxu0
    %v597 = vadd.f32 %v455, %v573
    %v598 = vadd.f32 %v457, %v575
    %v599 = vadd.f32 %v460, %v578
    %v600 = vadd.f32 %v462, %v580
    %v601 = vadd.f32 %v465, %v583
    %v602 = vadd.f32 %v467, %v585
    %v603 = vadd.f32 %v470, %v588
    %v604 = vadd.f32 %v472, %v590
    %v605 = vadd.f32 %v475, %v593
    %v606 = vadd.f32 %v477, %v595
    %vm607 = vsmask.f32 2304
    %vm608 = vsmask.f32 6416
    %vm609 = vmor %vm607, %vm608
    %v610 = vrot.slane %v204, 5
    %v611 = vrot.slane %v207, 6
    %v612 = vor.u32 %v610, %v611
    %v613 = vrot.slane %v612, 4
    %v614 = vrot.slane %v217, 5
    %v615 = vrot.slane %v213, 6
    %v616 = vor.u32 %v614, %v615
    %v617 = vsel %vm609, %v613, %v616
    %v618 = vrot.slane %v616, 4
    %v619 = vrot.slane %v227, 5
    %v620 = vrot.slane %v223, 6
    %v621 = vor.u32 %v619, %v620
    %v622 = vsel %vm609, %v618, %v621
    %v623 = vrot.slane %v621, 4
    %v624 = vrot.slane %v237, 5
    %v625 = vrot.slane %v233, 6
    %v626 = vor.u32 %v624, %v625
    %v627 = vsel %vm609, %v623, %v626
    %v628 = vrot.slane %v626, 4
    %v629 = vrot.slane %v247, 5
    %v630 = vrot.slane %v243, 6
    %v631 = vor.u32 %v629, %v630
    %v632 = vsel %vm609, %v628, %v631
    %v633 = vrot.slane %v631, 4
    %v634 = vshrl.u32 %v189, 16
    %v636 = vrot.slane %v634, 5
    %v637 = vrot.slane %v253, 6
    %v638 = vor.u32 %v636, %v637
    %v639 = vsel %vm609, %v633, %v638
    %v640 = vrot.slane %v258, 5
    %v641 = vrot.slane %v261, 6
    %v642 = vor.u32 %v640, %v641
    %v643 = vrot.slane %v642, 4
    %v644 = vrot.slane %v271, 5
    %v645 = vrot.slane %v267, 6
    %v646 = vor.u32 %v644, %v645
    %v647 = vsel %vm609, %v643, %v646
    %v648 = vrot.slane %v646, 4
    %v649 = vrot.slane %v281, 5
    %v650 = vrot.slane %v277, 6
    %v651 = vor.u32 %v649, %v650
    %v652 = vsel %vm609, %v648, %v651
    %v653 = vrot.slane %v651, 4
    %v654 = vrot.slane %v291, 5
    %v655 = vrot.slane %v287, 6
    %v656 = vor.u32 %v654, %v655
    %v657 = vsel %vm609, %v653, %v656
    %v658 = vrot.slane %v656, 4
    %v659 = vrot.slane %v301, 5
    %v660 = vrot.slane %v297, 6
    %v661 = vor.u32 %v659, %v660
    %v662 = vsel %vm609, %v658, %v661
    %v663 = vrot.slane %v661, 4
    %v664 = vshrl.u32 %v195, 16
    %v666 = vrot.slane %v664, 5
    %v667 = vrot.slane %v307, 6
    %v668 = vor.u32 %v666, %v667
    %v669 = vsel %vm609, %v663, %v668
    %s670 = scalar_lea.vmem %s3, 48
    %v671 = vld [vmem:[%s670] sm:$0xf]
    %v672 = vld [vmem:[%s670 + $0x4] sm:$0xf]
    %v673 = vld [vmem:[%s670 + $0x8] sm:$0xf]
    %v674 = vld [vmem:[%s670 + $0xc] sm:$0xf]
    %v675 = vunpack.c.l.b16 %v617
    %v676 = vunpack.c.l.b16 %v622
    %v677 = vunpack.c.l.b16 %v627
    %v678 = vunpack.c.l.b16 %v632
    %v679 = vunpack.c.l.b16 %v639
    %v680 = vunpack.c.l.b16 %v647
    %v681 = vunpack.c.l.b16 %v652
    %v682 = vunpack.c.l.b16 %v657
    %v683 = vunpack.c.l.b16 %v662
    %v684 = vunpack.c.l.b16 %v669
    %v685 = vpack.c.b16 %v676, %v675
    %v686 = vpack.c.b16 %v678, %v677
    %v687 = vpack.c.b16 %v680, %v679
    %v688 = vpack.c.b16 %v682, %v681
    %v689 = vpack.c.b16 %v684, %v683
    %v694 = vunpack.c.l.b16 %v671
    %v695 = vunpack.c.l.b16 %v672
    %v696 = vunpack.c.l.b16 %v673
    %v697 = vunpack.c.l.b16 %v674
    %v698 = vpack.c.b16 %v695, %v694
    %v699 = vpack.c.b16 %v697, %v696
    %v703 = vsel %vm343, %v685, 0
    %v706 = vsel %vm343, %v686, 0
    %v709 = vsel %vm343, %v687, 0
    %v712 = vsel %vm343, %v688, 0
    %v715 = vsel %vm343, %v689, 0
    %717 = vmatpush.bf16.msra.mxu0 0
    %718 = vmatpush.bf16.msra.mxu0 0
    %719 = vmatpush.bf16.msra.mxu0 0
    %720 = vmatpush.bf16.msra.mxu0 0
    %721 = vmatpush.bf16.msra.mxu0 0
    %722 = vmatpush.bf16.msra.mxu0 0
    %723 = vmatpush.bf16.msra.mxu0 %v699
    %724 = vmatpush.bf16.msra.mxu0 %v698
    %725 = vmatmul.bf16.gmra.mxu0 %v703
    %v726 = vpop.f32.mrf.mxu0
    %v727 = vadd.f32 0.0, %v726
    %v728 = vpop.f32.mrf.mxu0
    %v729 = vadd.f32 0.0, %v728
    %730 = vmatmul.bf16.gmra.mxu0 %v706
    %v731 = vpop.f32.mrf.mxu0
    %v732 = vadd.f32 0.0, %v731
    %v733 = vpop.f32.mrf.mxu0
    %v734 = vadd.f32 0.0, %v733
    %735 = vmatmul.bf16.gmra.mxu0 %v709
    %v736 = vpop.f32.mrf.mxu0
    %v737 = vadd.f32 0.0, %v736
    %v738 = vpop.f32.mrf.mxu0
    %v739 = vadd.f32 0.0, %v738
    %740 = vmatmul.bf16.gmra.mxu0 %v712
    %v741 = vpop.f32.mrf.mxu0
    %v742 = vadd.f32 0.0, %v741
    %v743 = vpop.f32.mrf.mxu0
    %v744 = vadd.f32 0.0, %v743
    %745 = vmatmul.bf16.gmra.mxu0 %v715
    %v746 = vpop.f32.mrf.mxu0
    %v747 = vadd.f32 0.0, %v746
    %v748 = vpop.f32.mrf.mxu0
    %v749 = vadd.f32 0.0, %v748
    %750 = vdwg.mxu0
    %v751 = vadd.f32 %v597, %v727
    %v752 = vadd.f32 %v598, %v729
    %v753 = vadd.f32 %v599, %v732
    %v754 = vadd.f32 %v600, %v734
    %v755 = vadd.f32 %v601, %v737
    %v756 = vadd.f32 %v602, %v739
    %v757 = vadd.f32 %v603, %v742
    %v758 = vadd.f32 %v604, %v744
    %v759 = vadd.f32 %v605, %v747
    %v760 = vadd.f32 %v606, %v749
    %v761 = vld [vmem:[%s4] sm:$0x1]
    %v763 = vperm.slane %v761, 0
    %v765 = vadd.f32 %v751, %v763
    %v766 = vadd.f32 %v752, %v763
    %v767 = vadd.f32 %v753, %v763
    %v768 = vadd.f32 %v754, %v763
    %v769 = vadd.f32 %v755, %v763
    %v770 = vadd.f32 %v756, %v763
    %v771 = vadd.f32 %v757, %v763
    %v772 = vadd.f32 %v758, %v763
    %v773 = vadd.f32 %v759, %v763
    %v774 = vadd.f32 %v760, %v763
    %v775 = vmax.f32 %v765, 0.0
    %v776 = vmax.f32 %v766, 0.0
    %v777 = vmax.f32 %v767, 0.0
    %v778 = vmax.f32 %v768, 0.0
    %v779 = vmax.f32 %v769, 0.0
    %v780 = vmax.f32 %v770, 0.0
    %v781 = vmax.f32 %v771, 0.0
    %v782 = vmax.f32 %v772, 0.0
    %v783 = vmax.f32 %v773, 0.0
    %v784 = vmax.f32 %v774, 0.0
    %v785 = vpack.c.bf16 %v775, %v775
    %v786 = vpack.c.bf16 %v776, %v776
    %v787 = vpack.c.bf16 %v777, %v777
    %v788 = vpack.c.bf16 %v778, %v778
    %v789 = vpack.c.bf16 %v779, %v779
    %v790 = vpack.c.bf16 %v780, %v780
    %v791 = vpack.c.bf16 %v781, %v781
    %v792 = vpack.c.bf16 %v782, %v782
    %v793 = vpack.c.bf16 %v783, %v783
    %v794 = vpack.c.bf16 %v784, %v784
    %v795 = vld [vmem:[#allocation5] sm:$0xf]
    %v796 = vld [vmem:[#allocation5 + $0x4] sm:$0xf]
    %v797 = vld [vmem:[#allocation5 + $0x8] sm:$0xf]
    %v798 = vld [vmem:[#allocation5 + $0xc] sm:$0xf]
    %v799 = vld [vmem:[#allocation5 + $0x10] sm:$0xf]
    %v800 = vld [vmem:[#allocation5 + $0x14] sm:$0xf]
    %v801 = vld [vmem:[#allocation5 + $0x18] sm:$0xf]
    %v802 = vld [vmem:[#allocation5 + $0x1c] sm:$0xf]
    %v804 = vshrl.u32 %v785, 16
    %v806 = vrot.slane %v804, 4
    %v807 = vshll.u32 %v785, 16
    %v809 = vrot.slane %v807, 5
    %v810 = vor.u32 %v806, %v809
    %v811 = vrot.slane %v810, 4
    %v813 = vshll.u32 %v786, 16
    %v815 = vrot.slane %v813, 5
    %v816 = vsel %vm202, %v811, %v815
    %v817 = vshrl.u32 %v786, 16
    %v819 = vrot.slane %v817, 4
    %v820 = vor.u32 %v819, %v815
    %v821 = vrot.slane %v820, 4
    %v823 = vshll.u32 %v787, 16
    %v825 = vrot.slane %v823, 5
    %v826 = vsel %vm202, %v821, %v825
    %v827 = vshrl.u32 %v787, 16
    %v829 = vrot.slane %v827, 4
    %v830 = vor.u32 %v829, %v825
    %v831 = vrot.slane %v830, 4
    %v833 = vshll.u32 %v788, 16
    %v835 = vrot.slane %v833, 5
    %v836 = vsel %vm202, %v831, %v835
    %v837 = vshrl.u32 %v788, 16
    %v839 = vrot.slane %v837, 4
    %v840 = vor.u32 %v839, %v835
    %v841 = vrot.slane %v840, 4
    %v843 = vshll.u32 %v789, 16
    %v845 = vrot.slane %v843, 5
    %v846 = vsel %vm202, %v841, %v845
    %v848 = vshrl.u32 %v790, 16
    %v850 = vrot.slane %v848, 4
    %v851 = vshll.u32 %v790, 16
    %v853 = vrot.slane %v851, 5
    %v854 = vor.u32 %v850, %v853
    %v855 = vrot.slane %v854, 4
    %v857 = vshll.u32 %v791, 16
    %v859 = vrot.slane %v857, 5
    %v860 = vsel %vm202, %v855, %v859
    %v861 = vshrl.u32 %v791, 16
    %v863 = vrot.slane %v861, 4
    %v864 = vor.u32 %v863, %v859
    %v865 = vrot.slane %v864, 4
    %v867 = vshll.u32 %v792, 16
    %v869 = vrot.slane %v867, 5
    %v870 = vsel %vm202, %v865, %v869
    %v871 = vshrl.u32 %v792, 16
    %v873 = vrot.slane %v871, 4
    %v874 = vor.u32 %v873, %v869
    %v875 = vrot.slane %v874, 4
    %v877 = vshll.u32 %v793, 16
    %v879 = vrot.slane %v877, 5
    %v880 = vsel %vm202, %v875, %v879
    %v881 = vshrl.u32 %v793, 16
    %v883 = vrot.slane %v881, 4
    %v884 = vor.u32 %v883, %v879
    %v885 = vrot.slane %v884, 4
    %v887 = vshll.u32 %v794, 16
    %v889 = vrot.slane %v887, 5
    %v890 = vsel %vm202, %v885, %v889
    %s891 = scalar_lea.vmem [#allocation5], 32
    %v892 = vld [vmem:[%s891] sm:$0xf]
    %v893 = vld [vmem:[%s891 + $0x4] sm:$0xf]
    %v894 = vld [vmem:[%s891 + $0x8] sm:$0xf]
    %v895 = vld [vmem:[%s891 + $0xc] sm:$0xf]
    %v896 = vld [vmem:[%s891 + $0x10] sm:$0xf]
    %v897 = vld [vmem:[%s891 + $0x14] sm:$0xf]
    %v898 = vld [vmem:[%s891 + $0x18] sm:$0xf]
    %v899 = vld [vmem:[%s891 + $0x1c] sm:$0xf]
    %v900 = vunpack.c.l.b16 %v816
    %v901 = vunpack.c.l.b16 %v826
    %v902 = vunpack.c.l.b16 %v836
    %v903 = vunpack.c.l.b16 %v846
    %v904 = vunpack.c.l.b16 %v860
    %v905 = vunpack.c.l.b16 %v870
    %v906 = vunpack.c.l.b16 %v880
    %v907 = vunpack.c.l.b16 %v890
    %v908 = vpack.c.b16 %v901, %v900
    %v909 = vpack.c.b16 %v903, %v902
    %v910 = vpack.c.b16 %v905, %v904
    %v911 = vpack.c.b16 %v907, %v906
    %v920 = vunpack.c.l.b16 %v892
    %v921 = vunpack.c.l.b16 %v893
    %v922 = vunpack.c.l.b16 %v894
    %v923 = vunpack.c.l.b16 %v895
    %v924 = vunpack.c.l.b16 %v896
    %v925 = vunpack.c.l.b16 %v897
    %v926 = vunpack.c.l.b16 %v898
    %v927 = vunpack.c.l.b16 %v899
    %v928 = vpack.c.b16 %v921, %v920
    %v929 = vpack.c.b16 %v923, %v922
    %v930 = vpack.c.b16 %v925, %v924
    %v931 = vpack.c.b16 %v927, %v926
    %vm936 = vcmask 523264
    %v938 = vsel %vm936, %v908, 0
    %v941 = vsel %vm936, %v909, 0
    %v944 = vsel %vm936, %v910, 0
    %v947 = vsel %vm936, %v911, 0
    %949 = vmatpush.bf16.msra.mxu0 0
    %950 = vmatpush.bf16.msra.mxu0 0
    %951 = vmatpush.bf16.msra.mxu0 0
    %952 = vmatpush.bf16.msra.mxu0 0
    %953 = vmatpush.bf16.msra.mxu0 %v931
    %954 = vmatpush.bf16.msra.mxu0 %v930
    %955 = vmatpush.bf16.msra.mxu0 %v929
    %956 = vmatpush.bf16.msra.mxu0 %v928
    %957 = vmatmul.bf16.gmra.mxu0 %v938
    %v958 = vpop.f32.mrf.mxu0
    %v959 = vadd.f32 0.0, %v958
    %v960 = vpop.f32.mrf.mxu0
    %v961 = vadd.f32 0.0, %v960
    %962 = vmatmul.bf16.gmra.mxu0 %v941
    %v963 = vpop.f32.mrf.mxu0
    %v964 = vadd.f32 0.0, %v963
    %v965 = vpop.f32.mrf.mxu0
    %v966 = vadd.f32 0.0, %v965
    %967 = vmatmul.bf16.gmra.mxu0 %v944
    %v968 = vpop.f32.mrf.mxu0
    %v969 = vadd.f32 0.0, %v968
    %v970 = vpop.f32.mrf.mxu0
    %v971 = vadd.f32 0.0, %v970
    %972 = vmatmul.bf16.gmra.mxu0 %v947
    %v973 = vpop.f32.mrf.mxu0
    %v974 = vadd.f32 0.0, %v973
    %v975 = vpop.f32.mrf.mxu0
    %v976 = vadd.f32 0.0, %v975
    %977 = vdwg.mxu0
    %v986 = vunpack.c.l.b16 %v785
    %v987 = vunpack.c.l.b16 %v786
    %v988 = vunpack.c.l.b16 %v787
    %v989 = vunpack.c.l.b16 %v788
    %v990 = vunpack.c.l.b16 %v790
    %v991 = vunpack.c.l.b16 %v791
    %v992 = vunpack.c.l.b16 %v792
    %v993 = vunpack.c.l.b16 %v793
    %v994 = vpack.c.b16 %v987, %v986
    %v995 = vpack.c.b16 %v989, %v988
    %v996 = vpack.c.b16 %v991, %v990
    %v997 = vpack.c.b16 %v993, %v992
    %v1006 = vunpack.c.l.b16 %v795
    %v1007 = vunpack.c.l.b16 %v796
    %v1008 = vunpack.c.l.b16 %v797
    %v1009 = vunpack.c.l.b16 %v798
    %v1010 = vunpack.c.l.b16 %v799
    %v1011 = vunpack.c.l.b16 %v800
    %v1012 = vunpack.c.l.b16 %v801
    %v1013 = vunpack.c.l.b16 %v802
    %v1014 = vpack.c.b16 %v1007, %v1006
    %v1015 = vpack.c.b16 %v1009, %v1008
    %v1016 = vpack.c.b16 %v1011, %v1010
    %v1017 = vpack.c.b16 %v1013, %v1012
    %v1023 = vsel %vm936, %v994, 0
    %v1026 = vsel %vm936, %v995, 0
    %v1029 = vsel %vm936, %v996, 0
    %v1032 = vsel %vm936, %v997, 0
    %1034 = vmatpush.bf16.msra.mxu0 0
    %1035 = vmatpush.bf16.msra.mxu0 0
    %1036 = vmatpush.bf16.msra.mxu0 0
    %1037 = vmatpush.bf16.msra.mxu0 0
    %1038 = vmatpush.bf16.msra.mxu0 %v1017
    %1039 = vmatpush.bf16.msra.mxu0 %v1016
    %1040 = vmatpush.bf16.msra.mxu0 %v1015
    %1041 = vmatpush.bf16.msra.mxu0 %v1014
    %1042 = vmatmul.bf16.gmra.mxu0 %v1023
    %v1043 = vpop.f32.mrf.mxu0
    %v1044 = vadd.f32 %v959, %v1043
    %v1045 = vpop.f32.mrf.mxu0
    %v1046 = vadd.f32 %v961, %v1045
    %1047 = vmatmul.bf16.gmra.mxu0 %v1026
    %v1048 = vpop.f32.mrf.mxu0
    %v1049 = vadd.f32 %v964, %v1048
    %v1050 = vpop.f32.mrf.mxu0
    %v1051 = vadd.f32 %v966, %v1050
    %1052 = vmatmul.bf16.gmra.mxu0 %v1029
    %v1053 = vpop.f32.mrf.mxu0
    %v1054 = vadd.f32 %v969, %v1053
    %v1055 = vpop.f32.mrf.mxu0
    %v1056 = vadd.f32 %v971, %v1055
    %1057 = vmatmul.bf16.gmra.mxu0 %v1032
    %v1058 = vpop.f32.mrf.mxu0
    %v1059 = vadd.f32 %v974, %v1058
    %v1060 = vpop.f32.mrf.mxu0
    %v1061 = vadd.f32 %v976, %v1060
    %1062 = vdwg.mxu0
    %v1065 = vrot.slane %v785, 5
    %v1066 = vrot.slane %v1065, 4
    %v1067 = vrot.slane %v786, 5
    %v1068 = vsel %vm483, %v1066, %v1067
    %v1069 = vrot.slane %v1067, 4
    %v1070 = vrot.slane %v787, 5
    %v1071 = vsel %vm483, %v1069, %v1070
    %v1072 = vrot.slane %v1070, 4
    %v1073 = vrot.slane %v788, 5
    %v1074 = vsel %vm483, %v1072, %v1073
    %v1075 = vrot.slane %v1073, 4
    %v1076 = vrot.slane %v789, 5
    %v1077 = vsel %vm483, %v1075, %v1076
    %v1078 = vrot.slane %v790, 5
    %v1079 = vrot.slane %v1078, 4
    %v1080 = vrot.slane %v791, 5
    %v1081 = vsel %vm483, %v1079, %v1080
    %v1082 = vrot.slane %v1080, 4
    %v1083 = vrot.slane %v792, 5
    %v1084 = vsel %vm483, %v1082, %v1083
    %v1085 = vrot.slane %v1083, 4
    %v1086 = vrot.slane %v793, 5
    %v1087 = vsel %vm483, %v1085, %v1086
    %v1088 = vrot.slane %v1086, 4
    %v1089 = vrot.slane %v794, 5
    %v1090 = vsel %vm483, %v1088, %v1089
    %s1091 = scalar_lea.vmem [#allocation5], 64
    %v1092 = vld [vmem:[%s1091] sm:$0xf]
    %v1093 = vld [vmem:[%s1091 + $0x4] sm:$0xf]
    %v1094 = vld [vmem:[%s1091 + $0x8] sm:$0xf]
    %v1095 = vld [vmem:[%s1091 + $0xc] sm:$0xf]
    %v1096 = vld [vmem:[%s1091 + $0x10] sm:$0xf]
    %v1097 = vld [vmem:[%s1091 + $0x14] sm:$0xf]
    %v1098 = vld [vmem:[%s1091 + $0x18] sm:$0xf]
    %v1099 = vld [vmem:[%s1091 + $0x1c] sm:$0xf]
    %v1100 = vunpack.c.l.b16 %v1068
    %v1101 = vunpack.c.l.b16 %v1071
    %v1102 = vunpack.c.l.b16 %v1074
    %v1103 = vunpack.c.l.b16 %v1077
    %v1104 = vunpack.c.l.b16 %v1081
    %v1105 = vunpack.c.l.b16 %v1084
    %v1106 = vunpack.c.l.b16 %v1087
    %v1107 = vunpack.c.l.b16 %v1090
    %v1108 = vpack.c.b16 %v1101, %v1100
    %v1109 = vpack.c.b16 %v1103, %v1102
    %v1110 = vpack.c.b16 %v1105, %v1104
    %v1111 = vpack.c.b16 %v1107, %v1106
    %v1120 = vunpack.c.l.b16 %v1092
    %v1121 = vunpack.c.l.b16 %v1093
    %v1122 = vunpack.c.l.b16 %v1094
    %v1123 = vunpack.c.l.b16 %v1095
    %v1124 = vunpack.c.l.b16 %v1096
    %v1125 = vunpack.c.l.b16 %v1097
    %v1126 = vunpack.c.l.b16 %v1098
    %v1127 = vunpack.c.l.b16 %v1099
    %v1128 = vpack.c.b16 %v1121, %v1120
    %v1129 = vpack.c.b16 %v1123, %v1122
    %v1130 = vpack.c.b16 %v1125, %v1124
    %v1131 = vpack.c.b16 %v1127, %v1126
    %v1137 = vsel %vm936, %v1108, 0
    %v1140 = vsel %vm936, %v1109, 0
    %v1143 = vsel %vm936, %v1110, 0
    %v1146 = vsel %vm936, %v1111, 0
    %1148 = vmatpush.bf16.msra.mxu0 0
    %1149 = vmatpush.bf16.msra.mxu0 0
    %1150 = vmatpush.bf16.msra.mxu0 0
    %1151 = vmatpush.bf16.msra.mxu0 0
    %1152 = vmatpush.bf16.msra.mxu0 %v1131
    %1153 = vmatpush.bf16.msra.mxu0 %v1130
    %1154 = vmatpush.bf16.msra.mxu0 %v1129
    %1155 = vmatpush.bf16.msra.mxu0 %v1128
    %1156 = vmatmul.bf16.gmra.mxu0 %v1137
    %v1157 = vpop.f32.mrf.mxu0
    %v1158 = vadd.f32 0.0, %v1157
    %v1159 = vpop.f32.mrf.mxu0
    %v1160 = vadd.f32 0.0, %v1159
    %1161 = vmatmul.bf16.gmra.mxu0 %v1140
    %v1162 = vpop.f32.mrf.mxu0
    %v1163 = vadd.f32 0.0, %v1162
    %v1164 = vpop.f32.mrf.mxu0
    %v1165 = vadd.f32 0.0, %v1164
    %1166 = vmatmul.bf16.gmra.mxu0 %v1143
    %v1167 = vpop.f32.mrf.mxu0
    %v1168 = vadd.f32 0.0, %v1167
    %v1169 = vpop.f32.mrf.mxu0
    %v1170 = vadd.f32 0.0, %v1169
    %1171 = vmatmul.bf16.gmra.mxu0 %v1146
    %v1172 = vpop.f32.mrf.mxu0
    %v1173 = vadd.f32 0.0, %v1172
    %v1174 = vpop.f32.mrf.mxu0
    %v1175 = vadd.f32 0.0, %v1174
    %1176 = vdwg.mxu0
    %v1177 = vadd.f32 %v1044, %v1158
    %v1178 = vadd.f32 %v1046, %v1160
    %v1179 = vadd.f32 %v1049, %v1163
    %v1180 = vadd.f32 %v1051, %v1165
    %v1181 = vadd.f32 %v1054, %v1168
    %v1182 = vadd.f32 %v1056, %v1170
    %v1183 = vadd.f32 %v1059, %v1173
    %v1184 = vadd.f32 %v1061, %v1175
    %v1185 = vrot.slane %v804, 5
    %v1186 = vrot.slane %v807, 6
    %v1187 = vor.u32 %v1185, %v1186
    %v1188 = vrot.slane %v1187, 4
    %v1189 = vrot.slane %v817, 5
    %v1190 = vrot.slane %v813, 6
    %v1191 = vor.u32 %v1189, %v1190
    %v1192 = vsel %vm609, %v1188, %v1191
    %v1193 = vrot.slane %v1191, 4
    %v1194 = vrot.slane %v827, 5
    %v1195 = vrot.slane %v823, 6
    %v1196 = vor.u32 %v1194, %v1195
    %v1197 = vsel %vm609, %v1193, %v1196
    %v1198 = vrot.slane %v1196, 4
    %v1199 = vrot.slane %v837, 5
    %v1200 = vrot.slane %v833, 6
    %v1201 = vor.u32 %v1199, %v1200
    %v1202 = vsel %vm609, %v1198, %v1201
    %v1203 = vrot.slane %v1201, 4
    %v1204 = vshrl.u32 %v789, 16
    %v1206 = vrot.slane %v1204, 5
    %v1207 = vrot.slane %v843, 6
    %v1208 = vor.u32 %v1206, %v1207
    %v1209 = vsel %vm609, %v1203, %v1208
    %v1210 = vrot.slane %v848, 5
    %v1211 = vrot.slane %v851, 6
    %v1212 = vor.u32 %v1210, %v1211
    %v1213 = vrot.slane %v1212, 4
    %v1214 = vrot.slane %v861, 5
    %v1215 = vrot.slane %v857, 6
    %v1216 = vor.u32 %v1214, %v1215
    %v1217 = vsel %vm609, %v1213, %v1216
    %v1218 = vrot.slane %v1216, 4
    %v1219 = vrot.slane %v871, 5
    %v1220 = vrot.slane %v867, 6
    %v1221 = vor.u32 %v1219, %v1220
    %v1222 = vsel %vm609, %v1218, %v1221
    %v1223 = vrot.slane %v1221, 4
    %v1224 = vrot.slane %v881, 5
    %v1225 = vrot.slane %v877, 6
    %v1226 = vor.u32 %v1224, %v1225
    %v1227 = vsel %vm609, %v1223, %v1226
    %v1228 = vrot.slane %v1226, 4
    %v1229 = vshrl.u32 %v794, 16
    %v1231 = vrot.slane %v1229, 5
    %v1232 = vrot.slane %v887, 6
    %v1233 = vor.u32 %v1231, %v1232
    %v1234 = vsel %vm609, %v1228, %v1233
    %s1235 = scalar_lea.vmem [#allocation5], 96
    %v1236 = vld [vmem:[%s1235] sm:$0xf]
    %v1237 = vld [vmem:[%s1235 + $0x4] sm:$0xf]
    %v1238 = vld [vmem:[%s1235 + $0x8] sm:$0xf]
    %v1239 = vld [vmem:[%s1235 + $0xc] sm:$0xf]
    %v1240 = vld [vmem:[%s1235 + $0x10] sm:$0xf]
    %v1241 = vld [vmem:[%s1235 + $0x14] sm:$0xf]
    %v1242 = vld [vmem:[%s1235 + $0x18] sm:$0xf]
    %v1243 = vld [vmem:[%s1235 + $0x1c] sm:$0xf]
    %v1244 = vunpack.c.l.b16 %v1192
    %v1245 = vunpack.c.l.b16 %v1197
    %v1246 = vunpack.c.l.b16 %v1202
    %v1247 = vunpack.c.l.b16 %v1209
    %v1248 = vunpack.c.l.b16 %v1217
    %v1249 = vunpack.c.l.b16 %v1222
    %v1250 = vunpack.c.l.b16 %v1227
    %v1251 = vunpack.c.l.b16 %v1234
    %v1252 = vpack.c.b16 %v1245, %v1244
    %v1253 = vpack.c.b16 %v1247, %v1246
    %v1254 = vpack.c.b16 %v1249, %v1248
    %v1255 = vpack.c.b16 %v1251, %v1250
    %v1264 = vunpack.c.l.b16 %v1236
    %v1265 = vunpack.c.l.b16 %v1237
    %v1266 = vunpack.c.l.b16 %v1238
    %v1267 = vunpack.c.l.b16 %v1239
    %v1268 = vunpack.c.l.b16 %v1240
    %v1269 = vunpack.c.l.b16 %v1241
    %v1270 = vunpack.c.l.b16 %v1242
    %v1271 = vunpack.c.l.b16 %v1243
    %v1272 = vpack.c.b16 %v1265, %v1264
    %v1273 = vpack.c.b16 %v1267, %v1266
    %v1274 = vpack.c.b16 %v1269, %v1268
    %v1275 = vpack.c.b16 %v1271, %v1270
    %v1281 = vsel %vm936, %v1252, 0
    %v1284 = vsel %vm936, %v1253, 0
    %v1287 = vsel %vm936, %v1254, 0
    %v1290 = vsel %vm936, %v1255, 0
    %1292 = vmatpush.bf16.msra.mxu0 0
    %1293 = vmatpush.bf16.msra.mxu0 0
    %1294 = vmatpush.bf16.msra.mxu0 0
    %1295 = vmatpush.bf16.msra.mxu0 0
    %1296 = vmatpush.bf16.msra.mxu0 %v1275
    %1297 = vmatpush.bf16.msra.mxu0 %v1274
    %1298 = vmatpush.bf16.msra.mxu0 %v1273
    %1299 = vmatpush.bf16.msra.mxu0 %v1272
    %1300 = vmatmul.bf16.gmra.mxu0 %v1281
    %v1301 = vpop.f32.mrf.mxu0
    %v1302 = vadd.f32 0.0, %v1301
    %v1303 = vpop.f32.mrf.mxu0
    %v1304 = vadd.f32 0.0, %v1303
    %1305 = vmatmul.bf16.gmra.mxu0 %v1284
    %v1306 = vpop.f32.mrf.mxu0
    %v1307 = vadd.f32 0.0, %v1306
    %v1308 = vpop.f32.mrf.mxu0
    %v1309 = vadd.f32 0.0, %v1308
    %1310 = vmatmul.bf16.gmra.mxu0 %v1287
    %v1311 = vpop.f32.mrf.mxu0
    %v1312 = vadd.f32 0.0, %v1311
    %v1313 = vpop.f32.mrf.mxu0
    %v1314 = vadd.f32 0.0, %v1313
    %1315 = vmatmul.bf16.gmra.mxu0 %v1290
    %v1316 = vpop.f32.mrf.mxu0
    %v1317 = vadd.f32 0.0, %v1316
    %v1318 = vpop.f32.mrf.mxu0
    %v1319 = vadd.f32 0.0, %v1318
    %1320 = vdwg.mxu0
    %v1321 = vadd.f32 %v1177, %v1302
    %v1322 = vadd.f32 %v1178, %v1304
    %v1323 = vadd.f32 %v1179, %v1307
    %v1324 = vadd.f32 %v1180, %v1309
    %v1325 = vadd.f32 %v1181, %v1312
    %v1326 = vadd.f32 %v1182, %v1314
    %v1327 = vadd.f32 %v1183, %v1317
    %v1328 = vadd.f32 %v1184, %v1319
    %v1329 = vld [vmem:[%s6] sm:$0x1]
    %v1331 = vperm.slane %v1329, 0
    %v1333 = vadd.f32 %v1321, %v1331
    %v1334 = vadd.f32 %v1322, %v1331
    %v1335 = vadd.f32 %v1323, %v1331
    %v1336 = vadd.f32 %v1324, %v1331
    %v1337 = vadd.f32 %v1325, %v1331
    %v1338 = vadd.f32 %v1326, %v1331
    %v1339 = vadd.f32 %v1327, %v1331
    %v1340 = vadd.f32 %v1328, %v1331
    %v1341 = vmax.f32 %v1333, 0.0
    %v1342 = vmax.f32 %v1334, 0.0
    %v1343 = vmax.f32 %v1335, 0.0
    %v1344 = vmax.f32 %v1336, 0.0
    %v1345 = vmax.f32 %v1337, 0.0
    %v1346 = vmax.f32 %v1338, 0.0
    %v1347 = vmax.f32 %v1339, 0.0
    %v1348 = vmax.f32 %v1340, 0.0
    %v1349 = vmax.f32 %v1341, %v1343
    %vm1350 = vcmask 1040384
    %v1351 = vsel %vm1350, %v1344, -inf
    %v1352 = vmax.f32 %v1342, %v1351
    %v1353 = vmax.f32 %v1349, %v1352
    %v1354 = vrot.slane %v1353, 4
    %v1355 = vmax.f32 %v1353, %v1354
    %v1356 = vrot.slane %v1355, 2
    %v1357 = vmax.f32 %v1355, %v1356
    %v1358 = vrot.slane %v1357, 1
    %v1359 = vmax.f32 %v1357, %v1358
    %v1360 = vmax.f32 %v1345, %v1347
    %v1361 = vsel %vm1350, %v1348, -inf
    %v1362 = vmax.f32 %v1346, %v1361
    %v1363 = vmax.f32 %v1360, %v1362
    %v1364 = vrot.slane %v1363, 4
    %v1365 = vmax.f32 %v1363, %v1364
    %v1366 = vrot.slane %v1365, 2
    %v1367 = vmax.f32 %v1365, %v1366
    %v1368 = vrot.slane %v1367, 1
    %v1369 = vmax.f32 %v1367, %v1368
    %vm1372 = vcmask 1041409
    %v1373 = vsel %vm1372, %v1369, %v1359
    %1375 = vst [vmem:[#allocation7] sm:$0x3] %v1373
    // Predicated region
    $region38: #{tpu_custom_call.1} parent=1 // pred_check
      _
    $region39: #{tpu_custom_call.1} parent=1 // pred_check_branch
      %1377 = sbr.rel (0) target = $region41
    $region40: #{tpu_custom_call.1} parent=1 // pred_region
      %1379 = vsyncadd [#allocation4], 0
      %s1381 = sshll.u32 [#allocation7], 4
      %s1382 = int_to_ptr.vmem [resolvable:$true] %s1381
      %s1383 = sshll.u32 %s7, 4
      %s1384 = int_to_ptr.hbm [resolvable:$true] %s1383
      %1386 = dma.vmem_to_hbm [thread:$0]  %s1382, 32, %s1384, [#allocation4]
    $region41: #{tpu_custom_call.1} parent=1 // pred_fallthru
      _
    // Predicated region
    $region42: #{tpu_custom_call.1} parent=1 // pred_check
      _
    $region43: #{tpu_custom_call.1} parent=1 // pred_check_branch
      %1388 = sbr.rel (0) target = $region45
    $region44: #{tpu_custom_call.1} parent=1 // pred_region
      %1390 = dma.done [#allocation4], 32
    $region45: #{tpu_custom_call.1} parent=1 // pred_fallthru
      _
    %1391 = vsyncpa [#allocation3], 1
    %1392 = vsyncpa [#allocation6], 1
    %1393 = vsyncpa [#allocation4], 1

</llo_original>
